<compile_context>
chip_gen: v7x
topology: tpu7x:2x2x1
jax: 0.10.0
libtpu: 0.0.40
codegen_flags: <defaults>
</compile_context>

<pallas_src>
import functools

import jax
import jax.numpy as jnp
from jax.experimental import pallas as pl
from jax.experimental.pallas import tpu as pltpu


# ----------------------------- sizing helpers ------------------------------

def _round_up(x, m):
    return ((x + m - 1) // m) * m


def _buf_bytes(shape, dtype):
    """Approximate VMEM bytes of a buffer after (sublane, lane) tiling."""
    itemsize = jnp.dtype(dtype).itemsize
    sub_tile = max(8, 32 // itemsize)            # f32: 8, bf16: 16, int8: 32
    dims = list(shape)
    if len(dims) == 1:
        dims = [1] + dims
    lanes = _round_up(int(dims[-1]), 128)
    subs = _round_up(int(dims[-2]), sub_tile)
    lead = 1
    for d in dims[:-2]:
        lead *= int(d)
    return lead * subs * lanes * itemsize


def _vmem_capacity_bytes():
    try:
        return int(pltpu.get_tpu_info().vmem_capacity_bytes)
    except Exception:                            # conservative (v7x-sized)
        return 64 * 1024 * 1024


def _footprint_bytes(TL, HB, padding, C_in, C_out, K, x_dtype, cdt, out_dtype,
                     w_shape, use_slab, slab_in_scratch):
    """Estimated VMEM footprint of one grid step (double-buffered I/O)."""
    fp = 2 * _buf_bytes((C_in, TL), x_dtype)             # current x tile
    if HB:
        fp += 2 * _buf_bytes((C_in, HB), x_dtype)        # halo tile
    fp += 2 * _buf_bytes(w_shape, cdt)                   # weights (resident)
    fp += 2 * _buf_bytes((2 * C_out, 1), jnp.float32)    # biases
    fp += 2 * _buf_bytes((C_out, TL), out_dtype)         # output tile
    fp += _buf_bytes((C_in, padding + TL), cdt)          # local window scratch
    if use_slab and slab_in_scratch:
        fp += _buf_bytes((K * C_in, TL), cdt)            # im2col slab scratch
    return fp


def _choose_l_tile(L, padding, budget, max_l_tile, footprint_fn):
    """Largest lane-dense tile (multiple of 128 dividing L) that fits budget."""
    HB = _round_up(padding, 128) if padding > 0 else 0
    cands = [tl for tl in range(128, min(L, max_l_tile) + 1, 128) if L % tl == 0]
    for tl in sorted(cands, reverse=True):
        multi = (L // tl) > 1
        hb = HB if (multi and padding > 0) else 0
        if hb and tl % hb != 0:                  # halo block must tile the tile
            continue
        if footprint_fn(tl, hb) <= budget:
            return tl, hb
    # Fallback: a single full-extent tile (small or awkward L).
    return L, 0


# --------------------------------- kernel ----------------------------------

def _temporal_block_kernel(*refs, K, dilation, padding, TL, C_in, C_out,
                           has_halo, halo_width, identity_res, use_slab,
                           slab_in_scratch, compute_dtype):
    """One (batch, L-tile) grid step.

    refs = (x_tile, [halo_tile], w, b, out, xloc_scratch, [slab_scratch])
      x_tile  : (C_in, TL)                 current tile of x (original dtype)
      halo    : (C_in, HB)                 128-wide window ending at the tile
      w       : slab: (R, K*C_in)          R = 2*C_out (downsample) or C_out
                kaccum: (K[+1], C_out, C_in)
      b       : (2*C_out, 1) f32           [conv bias ; residual bias]
      out     : (C_out, TL)
      xloc    : (C_in, padding + TL)       causally padded local window (cdt)
      slab    : (K*C_in, TL)               persistent im2col slab (cdt)
    """
    it = iter(refs)
    x_ref = next(it)
    halo_ref = next(it) if has_halo else None
    w_ref = next(it)
    b_ref = next(it)
    out_ref = next(it)
    xloc_ref = next(it)
    slab_ref = next(it) if (use_slab and slab_in_scratch) else None

    lt = pl.program_id(1)
    cdt = compute_dtype

    cur = x_ref[...]                                         # (C_in, TL)

    # Local causally-padded window [left halo | current tile], cast once here.
    if padding > 0:
        zeros_left = jnp.zeros((C_in, padding), cdt)
        if has_halo:
            halo_tail = halo_ref[:, halo_width - padding:].astype(cdt)
            left = jnp.where(lt > 0, halo_tail, zeros_left)
        else:
            left = zeros_left
        xloc_ref[:, :padding] = left
    xloc_ref[:, padding:] = cur.astype(cdt)

    b = b_ref[...]                                           # (2*C_out, 1) f32

    if use_slab:
        # im2col: all K dilated taps stacked -> ONE MXU matmul (K*C_in deep).
        if slab_in_scratch:
            for k in range(K):
                slab_ref[k * C_in:(k + 1) * C_in, :] = (
                    xloc_ref[:, k * dilation:k * dilation + TL])
            slab = slab_ref[...]
        else:
            slab = jnp.concatenate(
                [xloc_ref[:, k * dilation:k * dilation + TL] for k in range(K)],
                axis=0)
        y = jnp.dot(w_ref[...], slab, preferred_element_type=jnp.float32)
        conv = jnp.maximum(y[:C_out] + b[:C_out], 0.0)       # relu1 (dropout=id)
        res = None if identity_res else y[C_out:] + b[C_out:]
    else:
        # Large-C_in path: K accumulating matmuls straight from the window.
        acc = jnp.dot(w_ref[0], xloc_ref[:, 0:TL],
                      preferred_element_type=jnp.float32)
        for k in range(1, K):
            acc = acc + jnp.dot(
                w_ref[k], xloc_ref[:, k * dilation:k * dilation + TL],
                preferred_element_type=jnp.float32)
        conv = jnp.maximum(acc + b[:C_out], 0.0)             # relu1 (dropout=id)
        if identity_res:
            res = None
        else:
            res = jnp.dot(w_ref[K], xloc_ref[:, padding:padding + TL],
                          preferred_element_type=jnp.float32) + b[C_out:]

    if identity_res:
        # Identity skip is added in f32 (not via the matmul), matching PyTorch.
        res = cur.astype(jnp.float32)

    out_ref[...] = jnp.maximum(conv + res, 0.0).astype(out_ref.dtype)  # relu2


# -------------------------------- wrapper -----------------------------------

def temporal_block_forward(x, v1, g1, b1, wd, bd, *, kernel_size, dilation,
                           padding, compute_dtype=jnp.float32,
                           out_dtype=jnp.float32, matmul_path="auto",
                           kaccum_min_cin=256, max_l_tile=2048):
    """x: (N, C_in, L) -> (N, C_out, L) in out_dtype.

    v1/g1/b1 : weight_norm'd conv1 params (v, g, bias).
    wd/bd    : 1x1 downsample params, or None for the identity residual.
    compute_dtype : matmul operand dtype (bf16 recommended on v6e/v7x);
                    accumulation and the ReLU/residual epilogue stay f32.
    matmul_path   : "auto" | "slab" | "kaccum".
    """
    N, C_in, L = x.shape
    C_out = v1.shape[0]
    K = kernel_size
    assert padding == dilation * (K - 1), (
        "causal TCN assumes padding == dilation * (kernel_size - 1)")
    identity_res = wd is None
    if identity_res:
        assert C_in == C_out, "identity residual requires n_inputs == n_outputs"

    # weight_norm: w = g * v / ||v||, norm over (in_ch, k) per out channel.
    v1f = v1.astype(jnp.float32)
    v_norm = jnp.sqrt(jnp.sum(v1f * v1f, axis=(1, 2), keepdims=True))
    w1 = g1.astype(jnp.float32).reshape(C_out, 1, 1) * v1f / v_norm  # (Co,Ci,K)

    if matmul_path == "auto":
        use_slab = C_in < kaccum_min_cin
    else:
        use_slab = (matmul_path == "slab")
    slab_in_scratch = use_slab and (C_in % 8 == 0)

    if use_slab:
        # slab row r = k*C_in + c  <->  w1[o, c, k]
        w_conv = jnp.transpose(w1, (0, 2, 1)).reshape(C_out, K * C_in)
        if identity_res:
            w_big = w_conv                                   # (C_out, K*C_in)
        else:
            w_res = jnp.concatenate(
                [jnp.zeros((C_out, (K - 1) * C_in), jnp.float32),
                 wd.astype(jnp.float32)], axis=1)            # tap K-1 == cur x
            w_big = jnp.concatenate([w_conv, w_res], axis=0)  # (2*C_out, K*C_in)
    else:
        w_taps = jnp.transpose(w1, (2, 0, 1))                # (K, C_out, C_in)
        if identity_res:
            w_big = w_taps
        else:
            w_big = jnp.concatenate(
                [w_taps, wd.astype(jnp.float32)[None]], axis=0)  # (K+1,Co,Ci)
    w_big = w_big.astype(compute_dtype)

    bd_eff = (jnp.zeros((C_out,), jnp.float32) if identity_res
              else bd.astype(jnp.float32))
    b_big = jnp.concatenate([b1.astype(jnp.float32), bd_eff]).reshape(
        2 * C_out, 1)

    # Tile selection and VMEM limit from the actual buffer sizes.
    capacity = _vmem_capacity_bytes()
    budget = int(0.55 * capacity)
    fp_fn = lambda tl, hb: _footprint_bytes(
        tl, hb, padding, C_in, C_out, K, x.dtype, compute_dtype, out_dtype,
        w_big.shape, use_slab, slab_in_scratch)
    TL, HB = _choose_l_tile(L, padding, budget, max_l_tile, fp_fn)
    assert L % TL == 0
    num_lt = L // TL
    has_halo = HB > 0

    fp = fp_fn(TL, HB)
    vmem_limit = max(int(1.5 * fp) + (2 << 20), 16 << 20)
    vmem_limit = min(vmem_limit, int(0.9 * capacity))

    kernel = functools.partial(
        _temporal_block_kernel, K=K, dilation=dilation, padding=padding, TL=TL,
        C_in=C_in, C_out=C_out, has_halo=has_halo, halo_width=HB,
        identity_res=identity_res, use_slab=use_slab,
        slab_in_scratch=slab_in_scratch, compute_dtype=compute_dtype)

    in_specs = [pl.BlockSpec((None, C_in, TL), lambda n, lt: (n, 0, lt))]
    operands = [x]
    if has_halo:
        hb_per = TL // HB
        in_specs.append(pl.BlockSpec(
            (None, C_in, HB),
            lambda n, lt: (n, 0, jnp.maximum(lt * hb_per - 1, 0))))
        operands.append(x)                       # same array, halo view
    if use_slab:
        in_specs.append(pl.BlockSpec(w_big.shape, lambda n, lt: (0, 0)))
    else:
        in_specs.append(pl.BlockSpec(w_big.shape, lambda n, lt: (0, 0, 0)))
    in_specs.append(pl.BlockSpec((2 * C_out, 1), lambda n, lt: (0, 0)))
    operands += [w_big, b_big]

    scratch_shapes = [pltpu.VMEM((C_in, padding + TL), compute_dtype)]
    if use_slab and slab_in_scratch:
        scratch_shapes.append(pltpu.VMEM((K * C_in, TL), compute_dtype))

    return pl.pallas_call(
        kernel,
        out_shape=jax.ShapeDtypeStruct((N, C_out, L), out_dtype),
        grid=(N, num_lt),
        in_specs=in_specs,
        out_specs=pl.BlockSpec((None, C_out, TL), lambda n, lt: (n, 0, lt)),
        scratch_shapes=scratch_shapes,
        compiler_params=pltpu.CompilerParams(
            dimension_semantics=("parallel", "parallel"),
            vmem_limit_bytes=vmem_limit),
    )(*operands)


# ------------------------------- reference ----------------------------------

def _reference(x, v1, g1, b1, wd, bd, *, kernel_size, dilation, padding):
    """Pure-JAX reference mirroring the PyTorch forward."""
    C_out = v1.shape[0]
    v_norm = jnp.sqrt(jnp.sum(v1 * v1, axis=(1, 2), keepdims=True))
    w1 = g1.reshape(C_out, 1, 1) * v1 / v_norm
    conv = jax.lax.conv_general_dilated(
        x, w1, window_strides=(1,), padding=[(padding, padding)],
        rhs_dilation=(dilation,), dimension_numbers=("NCH", "OIH", "NCH"))
    conv = conv[:, :, : x.shape[-1]]                         # Chomp1d
    out = jax.nn.relu(conv + b1.reshape(1, C_out, 1))        # relu1, dropout=id
    if wd is None:
        res = x
    else:
        res = jax.lax.conv_general_dilated(
            x, wd[:, :, None], window_strides=(1,), padding=[(0, 0)],
            dimension_numbers=("NCH", "OIH", "NCH")) + bd.reshape(1, C_out, 1)
    return jax.nn.relu(out + res)                            # relu2


# ---------------------------------- demo ------------------------------------

if __name__ == "__main__":
    kernel_size, dilation = 3, 2
    padding = (kernel_size - 1) * dilation                   # causal TCN padding
    cfg = dict(kernel_size=kernel_size, dilation=dilation, padding=padding)

    key = jax.random.PRNGKey(0)
    ks = jax.random.split(key, 12)

    def rnd(k, shape, scale=1.0):
        return jax.random.normal(k, shape, jnp.float32) * scale

    N, C_in, C_out = 2, 4, 8
    v1 = rnd(ks[0], (C_out, C_in, kernel_size), 0.3)
    g1 = jax.random.uniform(ks[1], (C_out,), jnp.float32, 0.5, 1.5)
    b1 = rnd(ks[2], (C_out,), 0.1)
    wd = rnd(ks[3], (C_out, C_in), 0.3)
    bd = rnd(ks[4], (C_out,), 0.1)

    def check(out, ref, atol, rtol, name):
        out = jnp.asarray(out, jnp.float32)
        assert out.shape == ref.shape, (name, out.shape, ref.shape)
        err = float(jnp.max(jnp.abs(out - ref)))
        assert jnp.allclose(out, ref, atol=atol, rtol=rtol), (name, err)

    # 1) Downsample residual, tiny L (single full-extent tile).
    x1 = rnd(ks[5], (N, C_in, 16))
    o1 = jax.block_until_ready(temporal_block_forward(x1, v1, g1, b1, wd, bd, **cfg))
    check(o1, _reference(x1, v1, g1, b1, wd, bd, **cfg), 5e-4, 5e-4, "small")

    # 2) Identity residual (n_in == n_out), multi-tile + halo + slab scratch.
    Cid = 8
    x2 = rnd(ks[6], (N, Cid, 256))
    v2 = rnd(ks[7], (Cid, Cid, kernel_size), 0.3)
    o2 = jax.block_until_ready(temporal_block_forward(
        x2, v2, g1, b1, None, None, max_l_tile=128, **cfg))
    check(o2, _reference(x2, v2, g1, b1, None, None, **cfg), 5e-4, 5e-4, "identity")

    # 3) Multi-tile L streaming with causal halo (4 L-tiles of 128).
    x3 = rnd(ks[8], (N, C_in, 512))
    o3 = jax.block_until_ready(temporal_block_forward(
        x3, v1, g1, b1, wd, bd, max_l_tile=128, **cfg))
    ref3 = _reference(x3, v1, g1, b1, wd, bd, **cfg)
    check(o3, ref3, 5e-4, 5e-4, "multi-tile")

    # 4) Sublane-aligned C_in (explicit im2col slab scratch), downsample res.
    Cb = 16
    x4 = rnd(ks[9], (N, Cb, 256))
    v4 = rnd(ks[10], (C_out, Cb, kernel_size), 0.3)
    wd4 = rnd(ks[11], (C_out, Cb), 0.3)
    o4 = jax.block_until_ready(temporal_block_forward(
        x4, v4, g1, b1, wd4, bd, max_l_tile=128, **cfg))
    ref4 = _reference(x4, v4, g1, b1, wd4, bd, **cfg)
    check(o4, ref4, 5e-4, 5e-4, "slab-scratch")

    # 5) Forced K-accumulating-matmul path (the large-C_in codepath).
    o5 = jax.block_until_ready(temporal_block_forward(
        x4, v4, g1, b1, wd4, bd, max_l_tile=128, matmul_path="kaccum", **cfg))
    check(o5, ref4, 5e-4, 5e-4, "kaccum")

    # 6) bf16 MXU operands + bf16 output (f32 accumulation & epilogue).
    o6 = jax.block_until_ready(temporal_block_forward(
        x3, v1, g1, b1, wd, bd, max_l_tile=128,
        compute_dtype=jnp.bfloat16, out_dtype=jnp.bfloat16, **cfg))
    check(o6, ref3, 0.25, 0.05, "bf16")

    print("KERNEL_OK")
</pallas_src>

<mosaic_0001>
module attributes {stable_mosaic.version = 11 : i64} {
  func.func @_temporal_block_kernel(%arg0: i32, %arg1: i32, %arg2: memref<1x4x16xf32, #tpu.memory_space<vmem>>, %arg3: memref<16x12xf32, #tpu.memory_space<vmem>>, %arg4: memref<16x1xf32, #tpu.memory_space<vmem>>, %arg5: memref<1x8x16xf32, #tpu.memory_space<vmem>>, %arg6: memref<4x20xf32, #tpu.memory_space<vmem>>) attributes {dimension_semantics = [#tpu.dimension_semantics<parallel>, #tpu.dimension_semantics<parallel>], iteration_bounds = array<i64: 2, 1>, scalar_prefetch = 0 : i64, scratch_operands = 1 : i64, tpu.core_type = #tpu.core_type<tc>, window_params = [{transform_indices = @transform_0, window_bounds = array<i64: 1, 4, 16>}, {pipeline_mode = #tpu.pipeline_mode<synchronous>, transform_indices = @transform_1, window_bounds = array<i64: 16, 12>}, {pipeline_mode = #tpu.pipeline_mode<synchronous>, transform_indices = @transform_2, window_bounds = array<i64: 16, 1>}, {transform_indices = @transform_3, window_bounds = array<i64: 1, 8, 16>}]} {
    %c0 = arith.constant 0 : index
    %c0_0 = arith.constant 0 : index
    %c0_1 = arith.constant 0 : index
    %0 = vector.load %arg2[%c0, %c0_0, %c0_1] : memref<1x4x16xf32, #tpu.memory_space<vmem>>, vector<1x4x16xf32>
    %1 = vector.shape_cast %0 : vector<1x4x16xf32> to vector<4x16xf32>
    %cst = arith.constant 0.000000e+00 : f32
    %2 = vector.broadcast %cst : f32 to vector<4x4xf32>
    %c0_2 = arith.constant 0 : index
    %c0_3 = arith.constant 0 : index
    %3 = vector.load %arg6[%c0_2, %c0_3] : memref<4x20xf32, #tpu.memory_space<vmem>>, vector<4x4xf32>
    tpu.vector_store %arg6[%c0_2, %c0_3], %2 {strides = array<i32>} : memref<4x20xf32, #tpu.memory_space<vmem>>, vector<4x4xf32>,
    %c0_4 = arith.constant 0 : index
    %c4 = arith.constant 4 : index
    %4 = vector.load %arg6[%c0_4, %c4] : memref<4x20xf32, #tpu.memory_space<vmem>>, vector<4x16xf32>
    tpu.vector_store %arg6[%c0_4, %c4], %1 {strides = array<i32>} : memref<4x20xf32, #tpu.memory_space<vmem>>, vector<4x16xf32>,
    %c0_5 = arith.constant 0 : index
    %c0_6 = arith.constant 0 : index
    %5 = vector.load %arg4[%c0_5, %c0_6] : memref<16x1xf32, #tpu.memory_space<vmem>>, vector<16x1xf32>
    %c0_7 = arith.constant 0 : index
    %c0_8 = arith.constant 0 : index
    %6 = vector.load %arg6[%c0_7, %c0_8] : memref<4x20xf32, #tpu.memory_space<vmem>>, vector<4x16xf32>
    %c0_9 = arith.constant 0 : index
    %c2 = arith.constant 2 : index
    %7 = vector.load %arg6[%c0_9, %c2] : memref<4x20xf32, #tpu.memory_space<vmem>>, vector<4x16xf32>
    %c0_10 = arith.constant 0 : index
    %c4_11 = arith.constant 4 : index
    %8 = vector.load %arg6[%c0_10, %c4_11] : memref<4x20xf32, #tpu.memory_space<vmem>>, vector<4x16xf32>
    %9 = tpu.concatenate %6, %7, %8 in 0 : vector<4x16xf32>, vector<4x16xf32>, vector<4x16xf32> -> vector<12x16xf32>
    %c0_12 = arith.constant 0 : index
    %c0_13 = arith.constant 0 : index
    %10 = vector.load %arg3[%c0_12, %c0_13] : memref<16x12xf32, #tpu.memory_space<vmem>>, vector<16x12xf32>
    %cst_14 = arith.constant dense<0.000000e+00> : vector<16x16xf32>
    %11 = tpu.matmul %10, %9, %cst_14 {dimension_numbers = #tpu.dot_dimension_numbers<[1], [0], [0], [1], [0, 0, 1, 1], [], []>} : vector<16x12xf32>, vector<12x16xf32>, vector<16x16xf32> -> vector<16x16xf32>
    %12 = vector.extract_strided_slice %11 {offsets = [0, 0], sizes = [8, 16], strides = [1, 1]} : vector<16x16xf32> to vector<8x16xf32>
    %13 = vector.extract_strided_slice %5 {offsets = [0, 0], sizes = [8, 1], strides = [1, 1]} : vector<16x1xf32> to vector<8x1xf32>
    %14 = vector.broadcast %13 : vector<8x1xf32> to vector<8x16xf32>
    %15 = arith.addf %12, %14 : vector<8x16xf32>
    %cst_15 = arith.constant 0.000000e+00 : f32
    %16 = vector.broadcast %cst_15 : f32 to vector<8x16xf32>
    %17 = arith.maximumf %15, %16 : vector<8x16xf32>
    %18 = vector.extract_strided_slice %11 {offsets = [8, 0], sizes = [8, 16], strides = [1, 1]} : vector<16x16xf32> to vector<8x16xf32>
    %19 = vector.extract_strided_slice %5 {offsets = [8, 0], sizes = [8, 1], strides = [1, 1]} : vector<16x1xf32> to vector<8x1xf32>
    %20 = vector.broadcast %19 : vector<8x1xf32> to vector<8x16xf32>
    %21 = arith.addf %18, %20 : vector<8x16xf32>
    %22 = arith.addf %17, %21 : vector<8x16xf32>
    %cst_16 = arith.constant 0.000000e+00 : f32
    %23 = vector.broadcast %cst_16 : f32 to vector<8x16xf32>
    %24 = arith.maximumf %22, %23 : vector<8x16xf32>
    %c0_17 = arith.constant 0 : index
    %c0_18 = arith.constant 0 : index
    %c0_19 = arith.constant 0 : index
    %25 = vector.load %arg5[%c0_17, %c0_18, %c0_19] : memref<1x8x16xf32, #tpu.memory_space<vmem>>, vector<1x8x16xf32>
    %26 = vector.shape_cast %25 : vector<1x8x16xf32> to vector<8x16xf32>
    %27 = vector.shape_cast %24 : vector<8x16xf32> to vector<1x8x16xf32>
    tpu.vector_store %arg5[%c0_17, %c0_18, %c0_19], %27 {strides = array<i32>} : memref<1x8x16xf32, #tpu.memory_space<vmem>>, vector<1x8x16xf32>,
    return
  }
  func.func @transform_0(%arg0: i32, %arg1: i32) -> (i32, i32, i32) {
    %c0_i32 = arith.constant 0 : i32
    %c0_i32_0 = arith.constant 0 : i32
    return %arg0, %c0_i32, %arg1 : i32, i32, i32
  }
  func.func @transform_1(%arg0: i32, %arg1: i32) -> (i32, i32) {
    %c0_i32 = arith.constant 0 : i32
    %c0_i32_0 = arith.constant 0 : i32
    %c0_i32_1 = arith.constant 0 : i32
    return %c0_i32, %c0_i32_0 : i32, i32
  }
  func.func @transform_2(%arg0: i32, %arg1: i32) -> (i32, i32) {
    %c0_i32 = arith.constant 0 : i32
    %c0_i32_0 = arith.constant 0 : i32
    %c0_i32_1 = arith.constant 0 : i32
    return %c0_i32, %c0_i32_0 : i32, i32
  }
  func.func @transform_3(%arg0: i32, %arg1: i32) -> (i32, i32, i32) {
    %c0_i32 = arith.constant 0 : i32
    %c0_i32_0 = arith.constant 0 : i32
    return %arg0, %c0_i32, %arg1 : i32, i32, i32
  }
}

</mosaic_0001>

<llo_original>
// kernel: tpu_custom_call.1
$region0: #{tpu_custom_call.1}
  #allocation0 [shape = 'u32[]', space=smem, size = 0x4, offset = 0x4, fixed_abs, tag = 'smem constant byte address 0x4 - core index']
  #allocation1 [shape = 'u32[144,128]{1,0:T(1,128)}', space=vmem, size = 0x12000, scoped, tag = 'internal scratch']
  #allocation2 [shape = 'f32[4,20]{1,0:T(4,128)}', space=vmem, size = 0x800, scoped, tag = 'scratch operand']
  %s0 = inlined_call_operand.hbm [shape: f32[2,4,16], index: 0, kind: input, shape index: {}]
  %s1 = inlined_call_operand.vmem [shape: f32[16,12], index: 1, kind: input, shape index: {}]
  %s2 = inlined_call_operand.vmem [shape: f32[16,1], index: 2, kind: input, shape index: {}]
  %s3 = inlined_call_operand.hbm [shape: f32[2,8,16], index: 3, kind: output, shape index: {}]
  %s4 = sld [smem:[#allocation0]]
  $region49: #{tpu_custom_call.1} parent=0
    _
  %s6 = ssub.s32 1, %s4
  %s7 = scalar_select 0, %s6, %s4
  $region1: #{tpu_custom_call.1} parent=0
    #allocation3 [shape = 'u8[4096]{0}', space=vmem, size = 0x1000, scoped, tag = 'input window, operand 0']
    #allocation4 [shape = 's32[2]{0}', space=sflag, size = 0x8, scoped, tag = 'scoped memory for tpu_custom_call.1']
    #allocation5 [shape = 's32[2]{0}', space=sflag, size = 0x8, scoped, tag = 'scoped memory for tpu_custom_call.1']
    #allocation6 [shape = 'u8[8192]{0}', space=vmem, size = 0x2000, scoped, tag = 'output window, operand 0']
    %8 = vsyncpa [#allocation4], 0
    %s9 = scalar_lea.sflag [#allocation4], 1
    %10 = vsyncpa %s9, 0
    %11 = vsyncpa [#allocation5], 0
    %s12 = scalar_lea.sflag [#allocation5], 1
    %13 = vsyncpa %s12, 0
    loop: start=0, step=1, limit=4
    $region2: #{tpu_custom_call.1} parent=1 // loop_pre_header
      _
    $region3: #{tpu_custom_call.1} parent=1 // loop_header
      %s15 = sphi 0, %s19
      %p16 = scmp.ge.s32.totalorder %s15, 4
      %s22 = sphi 0, %s34
      %s23 = sphi 0, %s30
      %s24 = sphi 0, %s22
      %s25 = sphi 0, %s23
      %s26 = sphi 0, %s24
      %s27 = sphi 0, %s25
      %s39 = sphi 0, %s41
      %s42 = sphi 0, %s39
      %s43 = sphi 0, %s42
      %s59 = sphi 0, %s43
      %s63 = sphi 0, %s63
      %s65 = sphi 0, %s63
      %s66 = sphi 0, %s65
      %s80 = sphi 0, %s66
      %s84 = sphi 0, %s84
      %s86 = sphi 0, %s84
      %s87 = sphi 0, %s86
      %s101 = sphi 0, %s87
      %s109 = sphi 0, %s111
      %s112 = sphi 0, %s109
      %s113 = sphi 0, %s112
      %s129 = sphi 0, %s113
    $region4: #{tpu_custom_call.1} parent=1 // loop_header_branch
      %18 = sbr.rel (%p16) target = $region8
    $region5: #{tpu_custom_call.1} parent=1 // loop_body
      %s20 = ssub.s32 %s15, 1
      %s21 = ssub.s32 %s15, 2
      %s28 = sadd.s32 1, %s23
      %p29 = scmp.ge.s32.totalorder %s28, 1
      %s30 = scalar_select %p29, 0, %s28
      %s31 = sadd.s32 1, %s22
      %s32 = scalar_select %p29, %s31, %s22
      %p33 = scmp.ge.s32.totalorder %s32, 2
      %s34 = scalar_select %p33, 0, %s32
      %s35 = ssub.s32 %s22, %s34
      %s36 = ssub.s32 %s23, %s30
      %s37 = sor.u32 %s35, %s36
      %p38 = scmp.eq.s32.totalorder %s37, 0
      %s40 = sadd.s32 %s39, 1
      %s41 = scalar_select %p38, %s39, %s40
      %p44 = pneg %p38
      %p45 = scmp.eq.s32.totalorder %s15, 1
      %p46 = por %p44, %p45
      %p47 = scmp.ne.s32.totalorder %s39, %s42
      %p48 = scmp.eq.s32.totalorder %s15, 0
      %p49 = por %p47, %p48
      %p50 = scmp.ne.s32.totalorder %s39, %s42
      %p51 = scmp.eq.s32.totalorder %s20, 1
      %p52 = por %p50, %p51
      %p53 = scmp.ne.s32.totalorder %s42, %s43
      %p54 = scmp.eq.s32.totalorder %s20, 0
      %p55 = por %p53, %p54
      %p56 = scmp.ne.s32.totalorder %s42, %s43
      %p57 = scmp.eq.s32.totalorder %s21, 1
      %p58 = por %p56, %p57
      %p60 = scmp.ne.s32.totalorder %s43, %s59
      %p61 = scmp.eq.s32.totalorder %s21, 0
      %p62 = por %p60, %p61
      %s64 = sadd.s32 %s63, 1
      %p67 = scmp.eq.s32.totalorder %s15, 1
      %p68 = scmp.ne.s32.totalorder %s63, %s65
      %p69 = scmp.eq.s32.totalorder %s15, 0
      %p70 = por %p68, %p69
      %p71 = scmp.ne.s32.totalorder %s63, %s65
      %p72 = scmp.eq.s32.totalorder %s20, 1
      %p73 = por %p71, %p72
      %p74 = scmp.ne.s32.totalorder %s65, %s66
      %p75 = scmp.eq.s32.totalorder %s20, 0
      %p76 = por %p74, %p75
      %p77 = scmp.ne.s32.totalorder %s65, %s66
      %p78 = scmp.eq.s32.totalorder %s21, 1
      %p79 = por %p77, %p78
      %p81 = scmp.ne.s32.totalorder %s66, %s80
      %p82 = scmp.eq.s32.totalorder %s21, 0
      %p83 = por %p81, %p82
      %s85 = sadd.s32 %s84, 1
      %p88 = scmp.eq.s32.totalorder %s15, 1
      %p89 = scmp.ne.s32.totalorder %s84, %s86
      %p90 = scmp.eq.s32.totalorder %s15, 0
      %p91 = por %p89, %p90
      %p92 = scmp.ne.s32.totalorder %s84, %s86
      %p93 = scmp.eq.s32.totalorder %s20, 1
      %p94 = por %p92, %p93
      %p95 = scmp.ne.s32.totalorder %s86, %s87
      %p96 = scmp.eq.s32.totalorder %s20, 0
      %p97 = por %p95, %p96
      %p98 = scmp.ne.s32.totalorder %s86, %s87
      %p99 = scmp.eq.s32.totalorder %s21, 1
      %p100 = por %p98, %p99
      %p102 = scmp.ne.s32.totalorder %s87, %s101
      %p103 = scmp.eq.s32.totalorder %s21, 0
      %p104 = por %p102, %p103
      %s105 = ssub.s32 %s22, %s34
      %s106 = ssub.s32 %s23, %s30
      %s107 = sor.u32 %s105, %s106
      %p108 = scmp.eq.s32.totalorder %s107, 0
      %s110 = sadd.s32 %s109, 1
      %s111 = scalar_select %p108, %s109, %s110
      %p114 = pneg %p108
      %p115 = scmp.eq.s32.totalorder %s15, 1
      %p116 = por %p114, %p115
      %p117 = scmp.ne.s32.totalorder %s109, %s112
      %p118 = scmp.eq.s32.totalorder %s15, 0
      %p119 = por %p117, %p118
      %p120 = scmp.ne.s32.totalorder %s109, %s112
      %p121 = scmp.eq.s32.totalorder %s20, 1
      %p122 = por %p120, %p121
      %p123 = scmp.ne.s32.totalorder %s112, %s113
      %p124 = scmp.eq.s32.totalorder %s20, 0
      %p125 = por %p123, %p124
      %p126 = scmp.ne.s32.totalorder %s112, %s113
      %p127 = scmp.eq.s32.totalorder %s21, 1
      %p128 = por %p126, %p127
      %p130 = scmp.ne.s32.totalorder %s113, %s129
      %p131 = scmp.eq.s32.totalorder %s21, 0
      %p132 = por %p130, %p131
      %p133 = scmp.le.s32.totalorder 1, %s15
      %p134 = scmp.lt.s32.totalorder %s15, 3
      %p135 = pnand %p133, %p134
      %p136 = pneg %p135
      // Predicated region
      $region9: #{tpu_custom_call.1} parent=5 // pred_check
        _
      $region10: #{tpu_custom_call.1} parent=5 // pred_check_branch
        %138 = sbr.rel (%p135) target = $region12
      $region11: #{tpu_custom_call.1} parent=5 // pred_region
        %s139 = ssub.s32 %s15, 1
        // Predicated region
        $region13: #{tpu_custom_call.1} parent=11 // pred_check
          %p140 = pneg %p76
        $region14: #{tpu_custom_call.1} parent=11 // pred_check_branch
          %142 = sbr.rel (%p140) target = $region16
        $region15: #{tpu_custom_call.1} parent=11 // pred_region
          _
        $region16: #{tpu_custom_call.1} parent=11 // pred_fallthru
          _
        // Predicated region
        $region17: #{tpu_custom_call.1} parent=11 // pred_check
          %p143 = pneg %p97
        $region18: #{tpu_custom_call.1} parent=11 // pred_check_branch
          %145 = sbr.rel (%p143) target = $region20
        $region19: #{tpu_custom_call.1} parent=11 // pred_region
          _
        $region20: #{tpu_custom_call.1} parent=11 // pred_fallthru
          _
      $region12: #{tpu_custom_call.1} parent=5 // pred_fallthru
        _
      %p146 = scmp.lt.s32.totalorder %s15, 2
      // Predicated region
      $region21: #{tpu_custom_call.1} parent=5 // pred_check
        %p147 = pneg %p146
      $region22: #{tpu_custom_call.1} parent=5 // pred_check_branch
        %149 = sbr.rel (%p147) target = $region24
      $region23: #{tpu_custom_call.1} parent=5 // pred_region
        // Predicated region
        $region25: #{tpu_custom_call.1} parent=23 // pred_check
          %p150 = pneg %p49
        $region26: #{tpu_custom_call.1} parent=23 // pred_check_branch
          %152 = sbr.rel (%p150) target = $region28
        $region27: #{tpu_custom_call.1} parent=23 // pred_region
          %s153 = sand.u32 %s39, 1
          %s154 = scalar_lea.sflag [#allocation4], %s153
          %s155 = sand.u32 %s39, 1
          %s156 = smul.addr %s155, 4
          %s157 = scalar_lea.vmem [#allocation3], %s156
          %s159 = ssub.s32 64, 64
          %160 = vsyncadd %s154, %s159
          %s161 = sadd.s32 %s23, %s22
          %s162 = smul.addr %s161, 64
          %s163 = scalar_lea.hbm %s0, %s162
          %s165 = sshll.u32 %s157, 4
          %s166 = int_to_ptr.vmem [resolvable:$true] %s165
          %168 = dma.hbm_to_vmem [thread:$0]  %s163, 64, %s166, %s154
        $region28: #{tpu_custom_call.1} parent=23 // pred_fallthru
          _
      $region24: #{tpu_custom_call.1} parent=5 // pred_fallthru
        _
      %p169 = scmp.le.s32.totalorder 1, %s15
      %p170 = scmp.lt.s32.totalorder %s15, 3
      %p171 = pnand %p169, %p170
      %p172 = pneg %p171
      // Predicated region
      $region29: #{tpu_custom_call.1} parent=5 // pred_check
        _
      $region30: #{tpu_custom_call.1} parent=5 // pred_check_branch
        %174 = sbr.rel (%p171) target = $region32
      $region31: #{tpu_custom_call.1} parent=5 // pred_region
        %s175 = ssub.s32 %s15, 1
        %s176 = sand.u32 %s42, 1
        %s177 = scalar_lea.sflag [#allocation4], %s176
        %s178 = sand.u32 %s42, 1
        %s179 = smul.addr %s178, 4
        %s180 = scalar_lea.vmem [#allocation3], %s179
        // Predicated region
        $region33: #{tpu_custom_call.1} parent=31 // pred_check
          %p181 = pneg %p55
        $region34: #{tpu_custom_call.1} parent=31 // pred_check_branch
          %183 = sbr.rel (%p181) target = $region36
        $region35: #{tpu_custom_call.1} parent=31 // pred_region
          %184 = dma.done %s177, 64
        $region36: #{tpu_custom_call.1} parent=31 // pred_fallthru
          _
        %s185 = sand.u32 %s42, 1
        %s186 = scalar_lea.sflag [#allocation4], %s185
        %s187 = sand.u32 %s42, 1
        %s188 = smul.addr %s187, 4
        %s189 = scalar_lea.vmem [#allocation3], %s188
        %p190 = pneg %p55
        %p191 = pneg %p52
        %p192 = pneg %p76
        %p193 = pneg %p73
        %p194 = pneg %p97
        %p195 = pneg %p94
        %p196 = pneg %p125
        %p197 = pneg %p122
        %s198 = sand.u32 %s112, 1
        %s199 = scalar_lea.sflag [#allocation5], %s198
        %s200 = sand.u32 %s112, 1
        %s201 = smul.addr %s200, 8
        %s202 = scalar_lea.vmem [#allocation6], %s201
        %v203 = vld [vmem:[%s180] sm:$0xf]
        %vm204 = vcmask 27648
        %205 = vst.msk [vmem:[#allocation2] sm:$0xf] %vm204, 0.0
        %207 = vrot.lane.b32.xlu0 %v203, 4
        %v208 = vpop.permute.xlu0 %207
        %vm210 = vcmask 158752
        %211 = vst.msk [vmem:[#allocation2] sm:$0xf] %vm210, %v208
        %v212 = vld [vmem:[%s2] sm:$0xff]
        %v213 = vld [vmem:[%s2 + $0x8] sm:$0xff]
        %v214 = vld [vmem:[#allocation2] sm:$0xf]
        %v216 = vrot.slane %v214, 4
        %217 = vrot.lane.b32.xlu0 %v216, 126
        %v218 = vpop.permute.xlu0 %217
        %220 = vrot.lane.b32.xlu0 %v214, 124
        %v221 = vpop.permute.xlu0 %220
        %vm222 = vcmask 1043456
        %v223 = vsel %vm222, %v214, %v218
        %v224 = vld [vmem:[%s1] sm:$0xff]
        %v225 = vld [vmem:[%s1 + $0x8] sm:$0xff]
        %vm226 = vcmask 97280
        %v228 = vsel %vm226, %v224, 0
        %v231 = vsel %vm226, %v225, 0
        %v233 = vsel %vm222, %v221, 0
        %235 = vmatprep.subr.mxu0 0.0
        %236 = vmatpush1.msra.mxu0 %v223
        %237 = vmatprep.subr.mxu0 0.0
        %238 = vmatpush1.msra.mxu0 %v233
        %239 = vmatprep.subr.mxu0 0.0
        %240 = vmatpush1.msra.mxu0 0.0
        %241 = vmatprep.subr.mxu0 0.0
        %242 = vmatpush1.msra.mxu0 0.0
        %243 = vmatprep.subr.mxu0 0.0
        %244 = vmatpush1.msra.mxu0 0.0
        %245 = vmatprep.subr.mxu0 0.0
        %246 = vmatpush1.msra.mxu0 0.0
        %247 = vmatprep.subr.mxu0 0.0
        %248 = vmatpush1.msra.mxu0 0.0
        %249 = vmatprep.subr.mxu0 0.0
        %250 = vmatpush1.msra.mxu0 0.0
        %251 = vmatprep.subr.mxu0 0.0
        %252 = vmatpush1.msra.mxu0 0.0
        %253 = vmatprep.subr.mxu0 0.0
        %254 = vmatpush1.msra.mxu0 0.0
        %255 = vmatprep.subr.mxu0 0.0
        %256 = vmatpush1.msra.mxu0 0.0
        %257 = vmatprep.subr.mxu0 0.0
        %258 = vmatpush1.msra.mxu0 0.0
        %259 = vmatprep.subr.mxu0 0.0
        %260 = vmatpush1.msra.mxu0 0.0
        %261 = vmatprep.subr.mxu0 0.0
        %262 = vmatpush1.msra.mxu0 0.0
        %263 = vmatprep.subr.mxu0 0.0
        %264 = vmatpush1.msra.mxu0 0.0
        %265 = vmatprep.subr.mxu0 0.0
        %266 = vmatpush1.msra.mxu0 0.0
        %267 = vmatprep.subr.mxu0 0.0
        %268 = vmatpush1.msra.mxu0 0.0
        %269 = vmatprep.subr.mxu0 0.0
        %270 = vmatpush1.msra.mxu0 0.0
        %271 = vmatprep.subr.mxu0 0.0
        %272 = vmatpush1.msra.mxu0 0.0
        %273 = vmatprep.subr.mxu0 0.0
        %274 = vmatpush1.msra.mxu0 0.0
        %275 = vmatprep.subr.mxu0 0.0
        %276 = vmatpush1.msra.mxu0 0.0
        %277 = vmatprep.subr.mxu0 0.0
        %278 = vmatpush1.msra.mxu0 0.0
        %279 = vmatprep.subr.mxu0 0.0
        %280 = vmatpush1.msra.mxu0 0.0
        %281 = vmatprep.subr.mxu0 0.0
        %282 = vmatpush1.msra.mxu0 0.0
        %283 = vmatprep.subr.mxu0 0.0
        %284 = vmatpush1.msra.mxu0 0.0
        %285 = vmatprep.subr.mxu0 0.0
        %286 = vmatpush1.msra.mxu0 0.0
        %287 = vmatprep.subr.mxu0 0.0
        %288 = vmatpush1.msra.mxu0 0.0
        %289 = vmatprep.subr.mxu0 0.0
        %290 = vmatpush1.msra.mxu0 0.0
        %291 = vmatprep.subr.mxu0 0.0
        %292 = vmatpush1.msra.mxu0 0.0
        %293 = vmatprep.subr.mxu0 0.0
        %294 = vmatpush1.msra.mxu0 0.0
        %295 = vmatprep.subr.mxu0 0.0
        %296 = vmatpush1.msra.mxu0 0.0
        %297 = vmatprep.subr.mxu0 0.0
        %298 = vmatpush1.msra.mxu0 0.0
        %299 = vmatprep.mubr.f32.mxu0 0.0
        %300 = vmatmul.mubr.f32.gmra.mrb[0].mxu0 %v228
        %v301 = vpop.f32.mrb[0].mxu0
        %v302 = vadd.f32 0.0, %v301
        %v303 = vpop.f32.mrb[0].mxu0
        %304 = vmatprep.mubr.f32.mxu0 0.0
        %305 = vmatmul.mubr.f32.gmra.mrb[0].mxu0 %v231
        %v306 = vpop.f32.mrb[0].mxu0
        %v307 = vadd.f32 0.0, %v306
        %v308 = vpop.f32.mrb[0].mxu0
        %309 = vdwg.mxu0
        %311 = vset.pattern.permute.xlu0 0
        %312 = vperm.xlu0 %311, %v212
        %v313 = vpop.permute.xlu0 %312
        %v315 = vadd.f32 %v302, %v313
        %v316 = vmax.f32 %v315, 0.0
        %318 = vset.pattern.permute.xlu0 0
        %319 = vperm.xlu0 %318, %v213
        %v320 = vpop.permute.xlu0 %319
        %v322 = vadd.f32 %v307, %v320
        %v323 = vadd.f32 %v316, %v322
        %v324 = vmax.f32 %v323, 0.0
        %vm325 = vcmask 130048
        %326 = vst.msk [vmem:[%s202] sm:$0xff] %vm325, %v324
        %s327 = sand.u32 %s112, 1
        %s328 = scalar_lea.sflag [#allocation5], %s327
        %s329 = sand.u32 %s112, 1
        %s330 = smul.addr %s329, 8
        %s331 = scalar_lea.vmem [#allocation6], %s330
        // Predicated region
        $region37: #{tpu_custom_call.1} parent=31 // pred_check
          %p332 = pneg %p122
        $region38: #{tpu_custom_call.1} parent=31 // pred_check_branch
          %334 = sbr.rel (%p332) target = $region40
        $region39: #{tpu_custom_call.1} parent=31 // pred_region
          %s336 = ssub.s32 128, 128
          %337 = vsyncadd %s328, %s336
          %s338 = sadd.s32 %s25, %s24
          %s339 = smul.addr %s338, 128
          %s340 = scalar_lea.hbm %s3, %s339
          %s342 = sshll.u32 %s331, 4
          %s343 = int_to_ptr.vmem [resolvable:$true] %s342
          %345 = dma.vmem_to_hbm [thread:$0]  %s343, 128, %s340, %s328
        $region40: #{tpu_custom_call.1} parent=31 // pred_fallthru
          _
      $region32: #{tpu_custom_call.1} parent=5 // pred_fallthru
        _
      %p346 = scmp.le.s32.totalorder 2, %s15
      // Predicated region
      $region41: #{tpu_custom_call.1} parent=5 // pred_check
        %p347 = pneg %p346
      $region42: #{tpu_custom_call.1} parent=5 // pred_check_branch
        %349 = sbr.rel (%p347) target = $region44
      $region43: #{tpu_custom_call.1} parent=5 // pred_region
        %s350 = ssub.s32 %s15, 2
        // Predicated region
        $region45: #{tpu_custom_call.1} parent=43 // pred_check
          %p351 = pneg %p128
        $region46: #{tpu_custom_call.1} parent=43 // pred_check_branch
          %353 = sbr.rel (%p351) target = $region48
        $region47: #{tpu_custom_call.1} parent=43 // pred_region
          %s354 = sand.u32 %s113, 1
          %s355 = scalar_lea.sflag [#allocation5], %s354
          %s356 = sand.u32 %s113, 1
          %s357 = smul.addr %s356, 8
          %s358 = scalar_lea.vmem [#allocation6], %s357
          %359 = dma.done %s355, 128
        $region48: #{tpu_custom_call.1} parent=43 // pred_fallthru
          _
      $region44: #{tpu_custom_call.1} parent=5 // pred_fallthru
        _
    $region6: #{tpu_custom_call.1} parent=1 // loop_footer
      %s19 = sadd.s32 1, %s15
    $region7: #{tpu_custom_call.1} parent=1 // loop_footer_branch
      %14 = sbr.rel target = $region3
    $region8: #{tpu_custom_call.1} parent=1 // loop_exit
      _
    %360 = vsyncpa [#allocation4], 1
    %s361 = scalar_lea.sflag [#allocation4], 1
    %362 = vsyncpa %s361, 1
    %363 = vsyncpa [#allocation5], 1
    %s364 = scalar_lea.sflag [#allocation5], 1
    %365 = vsyncpa %s364, 1

</llo_original>
